<compile_context>
chip_gen: v7x
topology: tpu7x:2x2x1
jax: 0.10.0
libtpu: 0.0.40
codegen_flags: <defaults>
</compile_context>

<pallas_src>
import functools
import math

import jax
import jax.numpy as jnp
from jax.experimental import pallas as pl
from jax.experimental.pallas import tpu as pltpu


# ----------------------------------------------------------------------------
# Pallas LayerNorm kernel (torch semantics: unbiased std, eps added to std)
# ----------------------------------------------------------------------------
def _layernorm_kernel(x_ref, gamma_ref, beta_ref, out_ref, *, d_model, eps):
    """x_ref/out_ref: (tb, D) in the I/O dtype; gamma/beta: (1, D) f32."""
    x = x_ref[...].astype(jnp.float32)                         # (tb, D) f32 compute

    # One-pass moments: two *independent* lane-axis reductions.
    s1 = jnp.sum(x, axis=-1, keepdims=True)                    # (tb, 1)
    s2 = jnp.sum(x * x, axis=-1, keepdims=True)                # (tb, 1)
    mean = s1 * jnp.float32(1.0 / d_model)
    # torch.Tensor.std defaults to the unbiased estimator (divide by D-1).
    denom = max(d_model - 1, 1)                                # avoid /0 for D==1 edge case
    var = (s2 - s1 * mean) * jnp.float32(1.0 / denom)
    var = jnp.maximum(var, 0.0)                                 # guard cancellation -> sqrt(neg)
    std = jnp.sqrt(var)
    # eps is added to std (torch ref), so rsqrt cannot be used directly.
    # Exact divide kept (per-row (tb,1) vector, negligible cost); switch to
    # pl.reciprocal(std + eps, approx=True) only if ~1e-3 tolerance is OK.
    inv = 1.0 / (std + jnp.float32(eps))

    out = gamma_ref[...] * ((x - mean) * inv) + beta_ref[...]
    out_ref[...] = out.astype(out_ref.dtype)


# ----------------------------------------------------------------------------
# Wrapper
# ----------------------------------------------------------------------------
def layernorm_forward(x, gamma, beta, *, eps=1e-6, row_tile=1024):
    """LayerNorm over the last dim of x, matching the PyTorch LayerNorm above.

    x     : (..., d_model) float32 or bfloat16 (I/O stays in x.dtype)
    gamma : (d_model,)  (a_2)
    beta  : (d_model,)  (b_2)
    """
    orig_shape = x.shape
    d_model = int(orig_shape[-1])
    n_rows = int(math.prod(orig_shape[:-1])) if len(orig_shape) > 1 else 1

    io_dtype = x.dtype
    io_bytes = jnp.dtype(io_dtype).itemsize

    x2 = x.reshape(n_rows, d_model)                     # no astype: native-dtype I/O
    g2 = gamma.reshape(1, d_model).astype(jnp.float32)  # tiny, resident params
    b2 = beta.reshape(1, d_model).astype(jnp.float32)

    # Sublane packing: 8 rows/vreg for 4-byte, 16 for 2-byte, 32 for 1-byte dtypes.
    align = max(8, 32 // io_bytes)

    # Largest row tile that keeps double-buffered in+out tiles within ~24 MiB.
    vmem_budget = 24 << 20
    cap = max(align, (vmem_budget // (4 * d_model * io_bytes)) // align * align)
    tb = min(int(row_tile), cap)
    # Keep >= 2 grid steps when possible so both v7x TensorCores ("parallel"
    # axis) get work instead of one idling on a single giant block.
    half_aligned = pl.cdiv(pl.cdiv(n_rows, 2), align) * align
    tb = min(tb, max(align, half_aligned))
    tb = max(align, (tb // align) * align)

    grid = pl.cdiv(n_rows, tb)   # partial tail block handled by Pallas clipping

    # Explicit scoped-VMEM limit sized to the chosen tile (+ params + slack).
    vmem_limit = int(min(96 << 20,
                         2 * 2 * tb * d_model * io_bytes + 4 * d_model * 4 + (4 << 20)))

    kernel = functools.partial(_layernorm_kernel, d_model=d_model, eps=float(eps))

    out = pl.pallas_call(
        kernel,
        out_shape=jax.ShapeDtypeStruct((n_rows, d_model), io_dtype),
        grid_spec=pltpu.PrefetchScalarGridSpec(
            num_scalar_prefetch=0,
            grid=(grid,),
            in_specs=[
                # streaming row tile of activations
                pl.BlockSpec((tb, d_model), lambda i: (i, 0)),
                # tiny constant-indexed scale/shift, resident across the grid
                pl.BlockSpec((1, d_model), lambda i: (0, 0)),
                pl.BlockSpec((1, d_model), lambda i: (0, 0)),
            ],
            out_specs=pl.BlockSpec((tb, d_model), lambda i: (i, 0)),
        ),
        compiler_params=pltpu.CompilerParams(
            dimension_semantics=("parallel",),        # v7x: 2 TCs split the row range
            vmem_limit_bytes=vmem_limit),
        cost_estimate=pl.CostEstimate(
            flops=8 * n_rows * d_model,               # a few VPU ops per element
            transcendentals=2 * n_rows,               # sqrt + reciprocal per row
            bytes_accessed=2 * n_rows * d_model * io_bytes + 2 * d_model * 4),
    )(x2, g2, b2)

    return out.reshape(orig_shape)


# ----------------------------------------------------------------------------
# Encoder forward: N stacked layers (opaque) followed by the Pallas LayerNorm
# ----------------------------------------------------------------------------
def encoder_forward(x, mask, gamma, beta, *, layer_fns=(), eps=1e-6, row_tile=1024):
    """Mirrors Encoder.forward: x -> layer_1 -> ... -> layer_N -> LayerNorm."""
    # TODO(synk): EncoderLayer (the `layer` ctor argument) is not defined in the
    # spec; layers are applied as opaque callables here, so the Pallas-implemented
    # compute is the final LayerNorm.
    for fn in layer_fns:
        x = fn(x, mask)
    return layernorm_forward(x, gamma, beta, eps=eps, row_tile=row_tile)


# ----------------------------------------------------------------------------
# Demo / self-check
# ----------------------------------------------------------------------------
if __name__ == "__main__":
    # Small shapes consistent with the module.  d_model=128 keeps the last dim
    # lane-dense (no masked partial stores), like real BERT hidden sizes.
    batch, seq, d_model = 2, 8, 128
    eps = 1e-6

    key = jax.random.PRNGKey(0)
    k_x, k_g, k_b = jax.random.split(key, 3)

    x = jax.random.normal(k_x, (batch, seq, d_model), dtype=jnp.float32)
    mask = jnp.ones((batch, 1, seq), dtype=jnp.float32)  # unused without layers
    gamma = 1.0 + 0.1 * jax.random.normal(k_g, (d_model,), dtype=jnp.float32)
    beta = 0.1 * jax.random.normal(k_b, (d_model,), dtype=jnp.float32)

    # Plain-JAX reference with torch semantics (unbiased std, eps on std).
    def ref_ln(xx):
        xx = xx.astype(jnp.float32)
        mean = jnp.mean(xx, axis=-1, keepdims=True)
        std = jnp.sqrt(jnp.sum((xx - mean) ** 2, axis=-1, keepdims=True) / (d_model - 1))
        return gamma * (xx - mean) / (std + eps) + beta

    # 1) f32 I/O (torch default dtype) — tight tolerance.
    out_f32 = jax.block_until_ready(encoder_forward(x, mask, gamma, beta, eps=eps))
    assert out_f32.shape == (batch, seq, d_model)
    assert out_f32.dtype == jnp.float32
    assert jnp.allclose(out_f32, ref_ln(x), atol=1e-5, rtol=1e-5)

    # 2) bf16 I/O (native activation dtype path) — bf16-level tolerance.
    x_bf16 = x.astype(jnp.bfloat16)
    out_bf16 = jax.block_until_ready(encoder_forward(x_bf16, mask, gamma, beta, eps=eps))
    assert out_bf16.dtype == jnp.bfloat16
    assert jnp.allclose(out_bf16.astype(jnp.float32), ref_ln(x_bf16), atol=3e-2, rtol=3e-2)

    print("KERNEL_OK")
</pallas_src>

<mosaic_0001>
module attributes {stable_mosaic.version = 11 : i64} {
  func.func @_layernorm_kernel(%arg0: i32, %arg1: memref<8x128xf32, #tpu.memory_space<vmem>>, %arg2: memref<1x128xf32, #tpu.memory_space<vmem>>, %arg3: memref<1x128xf32, #tpu.memory_space<vmem>>, %arg4: memref<8x128xf32, #tpu.memory_space<vmem>>) attributes {dimension_semantics = [#tpu.dimension_semantics<parallel>], iteration_bounds = array<i64: 2>, scalar_prefetch = 0 : i64, scratch_operands = 0 : i64, tpu.core_type = #tpu.core_type<tc>, window_params = [{transform_indices = @transform_0, window_bounds = array<i64: 8, 128>}, {pipeline_mode = #tpu.pipeline_mode<synchronous>, transform_indices = @transform_1, window_bounds = array<i64: 1, 128>}, {pipeline_mode = #tpu.pipeline_mode<synchronous>, transform_indices = @transform_2, window_bounds = array<i64: 1, 128>}, {transform_indices = @transform_3, window_bounds = array<i64: 8, 128>}]} {
    %c0 = arith.constant 0 : index
    %c0_0 = arith.constant 0 : index
    %0 = vector.load %arg1[%c0, %c0_0] : memref<8x128xf32, #tpu.memory_space<vmem>>, vector<8x128xf32>
    %cst = arith.constant dense<0.000000e+00> : vector<8xf32>
    %1 = vector.multi_reduction <add>, %0, %cst [1] : vector<8x128xf32> to vector<8xf32>
    %2 = vector.shape_cast %1 : vector<8xf32> to vector<8x1xf32>
    %3 = arith.mulf %0, %0 : vector<8x128xf32>
    %cst_1 = arith.constant dense<0.000000e+00> : vector<8xf32>
    %4 = vector.multi_reduction <add>, %3, %cst_1 [1] : vector<8x128xf32> to vector<8xf32>
    %5 = vector.shape_cast %4 : vector<8xf32> to vector<8x1xf32>
    %cst_2 = arith.constant 7.812500e-03 : f32
    %6 = vector.broadcast %cst_2 : f32 to vector<8x1xf32>
    %7 = arith.mulf %2, %6 : vector<8x1xf32>
    %8 = arith.mulf %2, %7 : vector<8x1xf32>
    %9 = arith.subf %5, %8 : vector<8x1xf32>
    %cst_3 = arith.constant 0.00787401571 : f32
    %10 = vector.broadcast %cst_3 : f32 to vector<8x1xf32>
    %11 = arith.mulf %9, %10 : vector<8x1xf32>
    %cst_4 = arith.constant 0.000000e+00 : f32
    %12 = vector.broadcast %cst_4 : f32 to vector<8x1xf32>
    %13 = arith.maximumf %11, %12 : vector<8x1xf32>
    %14 = math.sqrt %13 : vector<8x1xf32>
    %cst_5 = arith.constant 9.99999997E-7 : f32
    %15 = vector.broadcast %cst_5 : f32 to vector<8x1xf32>
    %16 = arith.addf %14, %15 : vector<8x1xf32>
    %cst_6 = arith.constant 1.000000e+00 : f32
    %17 = vector.broadcast %cst_6 : f32 to vector<8x1xf32>
    %18 = arith.divf %17, %16 : vector<8x1xf32>
    %c0_7 = arith.constant 0 : index
    %c0_8 = arith.constant 0 : index
    %19 = vector.load %arg2[%c0_7, %c0_8] : memref<1x128xf32, #tpu.memory_space<vmem>>, vector<1x128xf32>
    %20 = vector.broadcast %7 : vector<8x1xf32> to vector<8x128xf32>
    %21 = arith.subf %0, %20 : vector<8x128xf32>
    %22 = vector.broadcast %18 : vector<8x1xf32> to vector<8x128xf32>
    %23 = arith.mulf %21, %22 : vector<8x128xf32>
    %24 = vector.broadcast %19 : vector<1x128xf32> to vector<8x128xf32>
    %25 = arith.mulf %24, %23 : vector<8x128xf32>
    %c0_9 = arith.constant 0 : index
    %c0_10 = arith.constant 0 : index
    %26 = vector.load %arg3[%c0_9, %c0_10] : memref<1x128xf32, #tpu.memory_space<vmem>>, vector<1x128xf32>
    %27 = vector.broadcast %26 : vector<1x128xf32> to vector<8x128xf32>
    %28 = arith.addf %25, %27 : vector<8x128xf32>
    %c0_11 = arith.constant 0 : index
    %c0_12 = arith.constant 0 : index
    %29 = vector.load %arg4[%c0_11, %c0_12] : memref<8x128xf32, #tpu.memory_space<vmem>>, vector<8x128xf32>
    tpu.vector_store %arg4[%c0_11, %c0_12], %28 {strides = array<i32>} : memref<8x128xf32, #tpu.memory_space<vmem>>, vector<8x128xf32>,
    return
  }
  func.func @transform_0(%arg0: i32) -> (i32, i32) {
    %c0_i32 = arith.constant 0 : i32
    %c0_i32_0 = arith.constant 0 : i32
    return %arg0, %c0_i32 : i32, i32
  }
  func.func @transform_1(%arg0: i32) -> (i32, i32) {
    %c0_i32 = arith.constant 0 : i32
    %c0_i32_0 = arith.constant 0 : i32
    %c0_i32_1 = arith.constant 0 : i32
    return %c0_i32, %c0_i32_0 : i32, i32
  }
  func.func @transform_2(%arg0: i32) -> (i32, i32) {
    %c0_i32 = arith.constant 0 : i32
    %c0_i32_0 = arith.constant 0 : i32
    %c0_i32_1 = arith.constant 0 : i32
    return %c0_i32, %c0_i32_0 : i32, i32
  }
  func.func @transform_3(%arg0: i32) -> (i32, i32) {
    %c0_i32 = arith.constant 0 : i32
    %c0_i32_0 = arith.constant 0 : i32
    return %arg0, %c0_i32 : i32, i32
  }
}

</mosaic_0001>

<llo_original>
// kernel: tpu_custom_call.1
$region0: #{tpu_custom_call.1}
  #allocation0 [shape = 'u32[]', space=smem, size = 0x4, offset = 0x4, fixed_abs, tag = 'smem constant byte address 0x4 - core index']
  #allocation1 [shape = 'u32[144,128]{1,0:T(1,128)}', space=vmem, size = 0x12000, scoped, tag = 'internal scratch']
  %s0 = inlined_call_operand.hbm [shape: f32[16,128], index: 0, kind: input, shape index: {}]
  %s1 = inlined_call_operand.vmem [shape: f32[1,128], index: 1, kind: input, shape index: {}]
  %s2 = inlined_call_operand.vmem [shape: f32[1,128], index: 2, kind: input, shape index: {}]
  %s3 = inlined_call_operand.hbm [shape: f32[16,128], index: 3, kind: output, shape index: {}]
  %s4 = sld [smem:[#allocation0]]
  $region49: #{tpu_custom_call.1} parent=0
    _
  %s6 = ssub.s32 1, %s4
  %s7 = scalar_select 0, %s6, %s4
  $region1: #{tpu_custom_call.1} parent=0
    #allocation2 [shape = 'u8[8192]{0}', space=vmem, size = 0x2000, scoped, tag = 'input window, operand 0']
    #allocation3 [shape = 's32[2]{0}', space=sflag, size = 0x8, scoped, tag = 'scoped memory for tpu_custom_call.1']
    #allocation4 [shape = 's32[2]{0}', space=sflag, size = 0x8, scoped, tag = 'scoped memory for tpu_custom_call.1']
    #allocation5 [shape = 'u8[8192]{0}', space=vmem, size = 0x2000, scoped, tag = 'output window, operand 0']
    %8 = vsyncpa [#allocation3], 0
    %s9 = scalar_lea.sflag [#allocation3], 1
    %10 = vsyncpa %s9, 0
    %11 = vsyncpa [#allocation4], 0
    %s12 = scalar_lea.sflag [#allocation4], 1
    %13 = vsyncpa %s12, 0
    loop: start=0, step=1, limit=4
    $region2: #{tpu_custom_call.1} parent=1 // loop_pre_header
      _
    $region3: #{tpu_custom_call.1} parent=1 // loop_header
      %s15 = sphi 0, %s19
      %p16 = scmp.ge.s32.totalorder %s15, 4
      %s25 = sphi 0, %s27
      %s28 = sphi 0, %s25
      %s29 = sphi 0, %s28
      %s45 = sphi 0, %s29
      %s49 = sphi 0, %s49
      %s51 = sphi 0, %s49
      %s52 = sphi 0, %s51
      %s66 = sphi 0, %s52
      %s70 = sphi 0, %s70
      %s72 = sphi 0, %s70
      %s73 = sphi 0, %s72
      %s87 = sphi 0, %s73
      %s93 = sphi 0, %s95
      %s96 = sphi 0, %s93
      %s97 = sphi 0, %s96
      %s113 = sphi 0, %s97
    $region4: #{tpu_custom_call.1} parent=1 // loop_header_branch
      %18 = sbr.rel (%p16) target = $region8
    $region5: #{tpu_custom_call.1} parent=1 // loop_body
      %s20 = ssub.s32 %s15, 1
      %s21 = ssub.s32 %s15, 2
      %s22 = sadd.s32 %s15, 1
      %s23 = ssub.s32 %s15, %s22
      %p24 = scmp.eq.s32.totalorder %s23, 0
      %s26 = sadd.s32 %s25, 1
      %s27 = scalar_select %p24, %s25, %s26
      %p30 = pneg %p24
      %p31 = scmp.eq.s32.totalorder %s15, 1
      %p32 = por %p30, %p31
      %p33 = scmp.ne.s32.totalorder %s25, %s28
      %p34 = scmp.eq.s32.totalorder %s15, 0
      %p35 = por %p33, %p34
      %p36 = scmp.ne.s32.totalorder %s25, %s28
      %p37 = scmp.eq.s32.totalorder %s20, 1
      %p38 = por %p36, %p37
      %p39 = scmp.ne.s32.totalorder %s28, %s29
      %p40 = scmp.eq.s32.totalorder %s20, 0
      %p41 = por %p39, %p40
      %p42 = scmp.ne.s32.totalorder %s28, %s29
      %p43 = scmp.eq.s32.totalorder %s21, 1
      %p44 = por %p42, %p43
      %p46 = scmp.ne.s32.totalorder %s29, %s45
      %p47 = scmp.eq.s32.totalorder %s21, 0
      %p48 = por %p46, %p47
      %s50 = sadd.s32 %s49, 1
      %p53 = scmp.eq.s32.totalorder %s15, 1
      %p54 = scmp.ne.s32.totalorder %s49, %s51
      %p55 = scmp.eq.s32.totalorder %s15, 0
      %p56 = por %p54, %p55
      %p57 = scmp.ne.s32.totalorder %s49, %s51
      %p58 = scmp.eq.s32.totalorder %s20, 1
      %p59 = por %p57, %p58
      %p60 = scmp.ne.s32.totalorder %s51, %s52
      %p61 = scmp.eq.s32.totalorder %s20, 0
      %p62 = por %p60, %p61
      %p63 = scmp.ne.s32.totalorder %s51, %s52
      %p64 = scmp.eq.s32.totalorder %s21, 1
      %p65 = por %p63, %p64
      %p67 = scmp.ne.s32.totalorder %s52, %s66
      %p68 = scmp.eq.s32.totalorder %s21, 0
      %p69 = por %p67, %p68
      %s71 = sadd.s32 %s70, 1
      %p74 = scmp.eq.s32.totalorder %s15, 1
      %p75 = scmp.ne.s32.totalorder %s70, %s72
      %p76 = scmp.eq.s32.totalorder %s15, 0
      %p77 = por %p75, %p76
      %p78 = scmp.ne.s32.totalorder %s70, %s72
      %p79 = scmp.eq.s32.totalorder %s20, 1
      %p80 = por %p78, %p79
      %p81 = scmp.ne.s32.totalorder %s72, %s73
      %p82 = scmp.eq.s32.totalorder %s20, 0
      %p83 = por %p81, %p82
      %p84 = scmp.ne.s32.totalorder %s72, %s73
      %p85 = scmp.eq.s32.totalorder %s21, 1
      %p86 = por %p84, %p85
      %p88 = scmp.ne.s32.totalorder %s73, %s87
      %p89 = scmp.eq.s32.totalorder %s21, 0
      %p90 = por %p88, %p89
      %s91 = ssub.s32 %s15, %s22
      %p92 = scmp.eq.s32.totalorder %s91, 0
      %s94 = sadd.s32 %s93, 1
      %s95 = scalar_select %p92, %s93, %s94
      %p98 = pneg %p92
      %p99 = scmp.eq.s32.totalorder %s15, 1
      %p100 = por %p98, %p99
      %p101 = scmp.ne.s32.totalorder %s93, %s96
      %p102 = scmp.eq.s32.totalorder %s15, 0
      %p103 = por %p101, %p102
      %p104 = scmp.ne.s32.totalorder %s93, %s96
      %p105 = scmp.eq.s32.totalorder %s20, 1
      %p106 = por %p104, %p105
      %p107 = scmp.ne.s32.totalorder %s96, %s97
      %p108 = scmp.eq.s32.totalorder %s20, 0
      %p109 = por %p107, %p108
      %p110 = scmp.ne.s32.totalorder %s96, %s97
      %p111 = scmp.eq.s32.totalorder %s21, 1
      %p112 = por %p110, %p111
      %p114 = scmp.ne.s32.totalorder %s97, %s113
      %p115 = scmp.eq.s32.totalorder %s21, 0
      %p116 = por %p114, %p115
      %p117 = scmp.le.s32.totalorder 1, %s15
      %p118 = scmp.lt.s32.totalorder %s15, 3
      %p119 = pnand %p117, %p118
      %p120 = pneg %p119
      // Predicated region
      $region9: #{tpu_custom_call.1} parent=5 // pred_check
        _
      $region10: #{tpu_custom_call.1} parent=5 // pred_check_branch
        %122 = sbr.rel (%p119) target = $region12
      $region11: #{tpu_custom_call.1} parent=5 // pred_region
        %s123 = ssub.s32 %s15, 1
        // Predicated region
        $region13: #{tpu_custom_call.1} parent=11 // pred_check
          %p124 = pneg %p62
        $region14: #{tpu_custom_call.1} parent=11 // pred_check_branch
          %126 = sbr.rel (%p124) target = $region16
        $region15: #{tpu_custom_call.1} parent=11 // pred_region
          _
        $region16: #{tpu_custom_call.1} parent=11 // pred_fallthru
          _
        // Predicated region
        $region17: #{tpu_custom_call.1} parent=11 // pred_check
          %p127 = pneg %p83
        $region18: #{tpu_custom_call.1} parent=11 // pred_check_branch
          %129 = sbr.rel (%p127) target = $region20
        $region19: #{tpu_custom_call.1} parent=11 // pred_region
          _
        $region20: #{tpu_custom_call.1} parent=11 // pred_fallthru
          _
      $region12: #{tpu_custom_call.1} parent=5 // pred_fallthru
        _
      %p130 = scmp.lt.s32.totalorder %s15, 2
      // Predicated region
      $region21: #{tpu_custom_call.1} parent=5 // pred_check
        %p131 = pneg %p130
      $region22: #{tpu_custom_call.1} parent=5 // pred_check_branch
        %133 = sbr.rel (%p131) target = $region24
      $region23: #{tpu_custom_call.1} parent=5 // pred_region
        // Predicated region
        $region25: #{tpu_custom_call.1} parent=23 // pred_check
          %p134 = pneg %p35
        $region26: #{tpu_custom_call.1} parent=23 // pred_check_branch
          %136 = sbr.rel (%p134) target = $region28
        $region27: #{tpu_custom_call.1} parent=23 // pred_region
          %s137 = sand.u32 %s25, 1
          %s138 = scalar_lea.sflag [#allocation3], %s137
          %s139 = sand.u32 %s25, 1
          %s140 = smul.addr %s139, 8
          %s141 = scalar_lea.vmem [#allocation2], %s140
          %s143 = ssub.s32 128, 128
          %144 = vsyncadd %s138, %s143
          %s145 = smul.addr %s15, 128
          %s146 = scalar_lea.hbm %s0, %s145
          %s148 = sshll.u32 %s141, 4
          %s149 = int_to_ptr.vmem [resolvable:$true] %s148
          %151 = dma.hbm_to_vmem [thread:$0]  %s146, 128, %s149, %s138
        $region28: #{tpu_custom_call.1} parent=23 // pred_fallthru
          _
      $region24: #{tpu_custom_call.1} parent=5 // pred_fallthru
        _
      %p152 = scmp.le.s32.totalorder 1, %s15
      %p153 = scmp.lt.s32.totalorder %s15, 3
      %p154 = pnand %p152, %p153
      %p155 = pneg %p154
      // Predicated region
      $region29: #{tpu_custom_call.1} parent=5 // pred_check
        _
      $region30: #{tpu_custom_call.1} parent=5 // pred_check_branch
        %157 = sbr.rel (%p154) target = $region32
      $region31: #{tpu_custom_call.1} parent=5 // pred_region
        %s158 = ssub.s32 %s15, 1
        %s159 = sand.u32 %s28, 1
        %s160 = scalar_lea.sflag [#allocation3], %s159
        %s161 = sand.u32 %s28, 1
        %s162 = smul.addr %s161, 8
        %s163 = scalar_lea.vmem [#allocation2], %s162
        // Predicated region
        $region33: #{tpu_custom_call.1} parent=31 // pred_check
          %p164 = pneg %p41
        $region34: #{tpu_custom_call.1} parent=31 // pred_check_branch
          %166 = sbr.rel (%p164) target = $region36
        $region35: #{tpu_custom_call.1} parent=31 // pred_region
          %167 = dma.done %s160, 128
        $region36: #{tpu_custom_call.1} parent=31 // pred_fallthru
          _
        %s168 = sand.u32 %s28, 1
        %s169 = scalar_lea.sflag [#allocation3], %s168
        %s170 = sand.u32 %s28, 1
        %s171 = smul.addr %s170, 8
        %s172 = scalar_lea.vmem [#allocation2], %s171
        %p173 = pneg %p41
        %p174 = pneg %p38
        %p175 = pneg %p62
        %p176 = pneg %p59
        %p177 = pneg %p83
        %p178 = pneg %p80
        %p179 = pneg %p109
        %p180 = pneg %p106
        %s181 = sand.u32 %s96, 1
        %s182 = scalar_lea.sflag [#allocation4], %s181
        %s183 = sand.u32 %s96, 1
        %s184 = smul.addr %s183, 8
        %s185 = scalar_lea.vmem [#allocation5], %s184
        %v186 = vld [vmem:[%s163] sm:$0xff]
        %187 = vadd.xlane.f32.xlu0 %v186
        %v188 = vpop.xlane.xlu0 %187
        %v189 = vmul.f32 %v186, %v186
        %190 = vadd.xlane.f32.xlu0 %v189
        %v191 = vpop.xlane.xlu0 %190
        %v192 = vmul.f32 %v188, 0.0078125
        %v193 = vmul.f32 %v188, %v192
        %v194 = vsub.f32 %v191, %v193
        %v195 = vmul.f32 %v194, 0.007874016
        %v196 = vmax.f32 %v195, 0.0
        %v197 = vrsqrt.pop %v196
        %v198 = vmul.f32 %v196, %v197
        %vm199 = vcmp.eq.f32.partialorder %v196, inf
        %v200 = vsel %vm199, %v196, %v198
        %vm201 = vcmp.eq.f32.partialorder %v196, 0.0
        %v202 = vand.u32 %v196, 2147483648
        %v203 = vsel %vm201, %v202, %v200
        %v204 = vadd.f32 %v203, 1e-06
        %v205 = vrcp.pop %v204
        %v206 = vmul.f32 1.0, %v205
        %v207 = vld [vmem:[%s1] sm:$0x1]
        %v208 = vsub.f32 %v186, %v192
        %v209 = vmul.f32 %v208, %v206
        %v211 = vlaneseq
        %v212 = vshrl.u32 %v211, 7
        %v213 = vsub.s32 0, %v212
        %v214 = vrot.slane %v207, %v213
        %v216 = vmul.f32 %v214, %v209
        %v217 = vld [vmem:[%s2] sm:$0x1]
        %v219 = vlaneseq
        %v220 = vshrl.u32 %v219, 7
        %v221 = vsub.s32 0, %v220
        %v222 = vrot.slane %v217, %v221
        %v224 = vadd.f32 %v216, %v222
        %225 = vst [vmem:[%s185] sm:$0xff] %v224
        %s226 = sand.u32 %s96, 1
        %s227 = scalar_lea.sflag [#allocation4], %s226
        %s228 = sand.u32 %s96, 1
        %s229 = smul.addr %s228, 8
        %s230 = scalar_lea.vmem [#allocation5], %s229
        // Predicated region
        $region37: #{tpu_custom_call.1} parent=31 // pred_check
          %p231 = pneg %p106
        $region38: #{tpu_custom_call.1} parent=31 // pred_check_branch
          %233 = sbr.rel (%p231) target = $region40
        $region39: #{tpu_custom_call.1} parent=31 // pred_region
          %s235 = ssub.s32 128, 128
          %236 = vsyncadd %s227, %s235
          %s237 = smul.addr %s20, 128
          %s238 = scalar_lea.hbm %s3, %s237
          %s240 = sshll.u32 %s230, 4
          %s241 = int_to_ptr.vmem [resolvable:$true] %s240
          %243 = dma.vmem_to_hbm [thread:$0]  %s241, 128, %s238, %s227
        $region40: #{tpu_custom_call.1} parent=31 // pred_fallthru
          _
      $region32: #{tpu_custom_call.1} parent=5 // pred_fallthru
        _
      %p244 = scmp.le.s32.totalorder 2, %s15
      // Predicated region
      $region41: #{tpu_custom_call.1} parent=5 // pred_check
        %p245 = pneg %p244
      $region42: #{tpu_custom_call.1} parent=5 // pred_check_branch
        %247 = sbr.rel (%p245) target = $region44
      $region43: #{tpu_custom_call.1} parent=5 // pred_region
        %s248 = ssub.s32 %s15, 2
        // Predicated region
        $region45: #{tpu_custom_call.1} parent=43 // pred_check
          %p249 = pneg %p112
        $region46: #{tpu_custom_call.1} parent=43 // pred_check_branch
          %251 = sbr.rel (%p249) target = $region48
        $region47: #{tpu_custom_call.1} parent=43 // pred_region
          %s252 = sand.u32 %s97, 1
          %s253 = scalar_lea.sflag [#allocation4], %s252
          %s254 = sand.u32 %s97, 1
          %s255 = smul.addr %s254, 8
          %s256 = scalar_lea.vmem [#allocation5], %s255
          %257 = dma.done %s253, 128
        $region48: #{tpu_custom_call.1} parent=43 // pred_fallthru
          _
      $region44: #{tpu_custom_call.1} parent=5 // pred_fallthru
        _
    $region6: #{tpu_custom_call.1} parent=1 // loop_footer
      %s19 = sadd.s32 1, %s15
    $region7: #{tpu_custom_call.1} parent=1 // loop_footer_branch
      %14 = sbr.rel target = $region3
    $region8: #{tpu_custom_call.1} parent=1 // loop_exit
      _
    %258 = vsyncpa [#allocation3], 1
    %s259 = scalar_lea.sflag [#allocation3], 1
    %260 = vsyncpa %s259, 1
    %261 = vsyncpa [#allocation4], 1
    %s262 = scalar_lea.sflag [#allocation4], 1
    %263 = vsyncpa %s262, 1

</llo_original>
